<compile_context>
chip_gen: v6e
topology: v6e:2x2x1
jax: 0.10.0
libtpu: 0.0.40
codegen_flags: <defaults>
</compile_context>

<pallas_src>
import jax
import jax.numpy as jnp
from jax.experimental import pallas as pl
from jax.experimental.pallas import tpu as pltpu

LN_EPS = 1e-5
FEATURE_NODE_DIM = 9
DIMS = [FEATURE_NODE_DIM, 32, 64, 128, 256]


def _round_up(x, m):
    return ((x + m - 1) // m) * m


# --------------------------- VMEM budget / tiling --------------------------- #

_SUBLANE = {1: 32, 2: 16, 4: 8}  # second-minor tiling per itemsize


def _vmem_budget_bytes():
    """Usable per-core VMEM for this TPU generation (capacity minus headroom)."""
    try:
        cap = int(pltpu.get_tpu_info().vmem_capacity_bytes)
    except Exception:
        cap = 64 << 20  # conservative default: v7x per-TensorCore VMEM
    return max(cap - (16 << 20), 24 << 20)


def _buf_bytes(shape, itemsize, nbuf):
    """Padded VMEM footprint of one operand with `nbuf` pipeline buffers."""
    lead = 1
    for d in shape[:-2]:
        lead *= d
    rows = shape[-2] if len(shape) >= 2 else 1
    cols = shape[-1]
    return nbuf * lead * _round_up(rows, _SUBLANE[itemsize]) * _round_up(cols, 128) * itemsize


def _layer_vmem_bytes(tm, tk, cin, cout, g_pad, pooled, n_k):
    b = _buf_bytes((tm, tk), 1, 2)                        # int8 A block (dbl buf)
    b += _buf_bytes((tk, cin), 2, 1 if n_k == 1 else 2)   # bf16 X block (A@X operand)
    b += _buf_bytes((tm, cin), 2, 2)                      # bf16 X row block (root term)
    b += _buf_bytes((2, cin, cout), 4, 2)                 # stacked weights (worst case)
    b += _buf_bytes((3, cout), 4, 2)                      # [b_rel; gamma; beta]
    b += _buf_bytes((tm, cin), 4, 1)                      # f32 accumulator scratch
    if pooled:
        b += _buf_bytes((g_pad, tm), 4, 2)
        b += _buf_bytes((1, g_pad, cout), 4, 2)
    else:
        b += _buf_bytes((tm, cout), 2, 2)
    return b


def _choose_tiles(n_pad, cin, cout, g_pad, budget, pooled):
    """Pick (tm, tk) fitting the per-generation VMEM budget.

    Prefer tk == n_pad (X resident, fetched once), prefer >= 2 row tiles so the
    v7x 2-TC split / pipelining has work, then the largest row tile that fits.
    """
    tms = [t for t in (512, 256, 128) if n_pad % t == 0]
    tks = sorted({t for t in (n_pad, n_pad // 2, n_pad // 4, n_pad // 8,
                              4096, 2048, 1024, 512, 256, 128)
                  if t >= 128 and t % 128 == 0 and n_pad % t == 0}, reverse=True)
    for prefer_multi_row in (True, False):
        for tk in tks:
            n_k = n_pad // tk
            for tm in tms:
                if prefer_multi_row and n_pad > 128 and n_pad // tm < 2:
                    continue
                if _layer_vmem_bytes(tm, tk, cin, cout, g_pad, pooled, n_k) <= budget:
                    return tm, tk
    return 128, 128


# ------------------------------ kernel bodies ------------------------------- #

def _ln_relu(y, gamma, beta):
    # LayerNorm over the lane (feature) axis with two-pass variance, then ReLU.
    mu = jnp.mean(y, axis=-1, keepdims=True)
    d = y - mu
    var = jnp.mean(d * d, axis=-1, keepdims=True)
    yn = d * jax.lax.rsqrt(var + LN_EPS)
    return jnp.maximum(yn * gamma + beta, 0.0)


def _finalize(acc_ref, xr_ref, w_ref, p_ref):
    # y = (A@X) @ W_rel + X_rows @ W_root + b ; LayerNorm ; ReLU   (all f32)
    y = (jnp.dot(acc_ref[...], w_ref[0], preferred_element_type=jnp.float32)
         + jnp.dot(xr_ref[...].astype(jnp.float32), w_ref[1],
                   preferred_element_type=jnp.float32)
         + p_ref[0:1, :])
    return _ln_relu(y, p_ref[1:2, :], p_ref[2:3, :])


def _accumulate(a_ref, xb_ref, acc_ref):
    @pl.when(pl.program_id(1) == 0)
    def _():
        acc_ref[...] = jnp.zeros_like(acc_ref)

    # int8 adjacency block -> bf16 (exact for counts <= 127) feeding the MXU.
    a = a_ref[...].astype(jnp.float32).astype(jnp.bfloat16)
    acc_ref[...] += jnp.dot(a, xb_ref[...], preferred_element_type=jnp.float32)


def _conv_layer_kernel(a_ref, xb_ref, xr_ref, w_ref, p_ref, o_ref, acc_ref):
    _accumulate(a_ref, xb_ref, acc_ref)

    @pl.when(pl.program_id(1) == pl.num_programs(1) - 1)
    def _():
        o_ref[...] = _finalize(acc_ref, xr_ref, w_ref, p_ref).astype(o_ref.dtype)


def _conv_pool_kernel(a_ref, xb_ref, xr_ref, w_ref, p_ref, pool_ref, o_ref, acc_ref):
    _accumulate(a_ref, xb_ref, acc_ref)

    @pl.when(pl.program_id(1) == pl.num_programs(1) - 1)
    def _():
        act = _finalize(acc_ref, xr_ref, w_ref, p_ref)
        # Per-row-tile partial mean-pool: (G, TM) @ (TM, Cout); summed in JAX.
        o_ref[0] = jnp.dot(pool_ref[...], act, preferred_element_type=jnp.float32)


# ------------------------------ call wrappers ------------------------------- #

def _const_spec(shape, index_map):
    """BlockSpec for operands whose block index never changes: single-buffered."""
    try:
        return pl.BlockSpec(shape, index_map, pipeline_mode=pl.Buffered(1))
    except Exception:  # older jax: no pipeline_mode / pl.Buffered
        return pl.BlockSpec(shape, index_map)


def _call_conv_layer(adj_i8, xb, xr, w_stacked, pvec, *, budget, pool=None):
    """One GraphConv+LN+ReLU layer.  If `pool` is given, also does mean-pool."""
    n_pad = adj_i8.shape[0]
    cin = xb.shape[-1]
    cout = w_stacked.shape[-1]
    pooled = pool is not None
    g_pad = pool.shape[0] if pooled else 0

    tm, tk = _choose_tiles(n_pad, cin, cout, g_pad, budget, pooled)
    n_rows, n_k = n_pad // tm, n_pad // tk
    grid = (n_rows, n_k)

    a_spec = pl.BlockSpec((tm, tk), lambda i, k: (i, k))
    xb_index = lambda i, k: (k, 0)
    xb_spec = (_const_spec((tk, cin), xb_index) if n_k == 1
               else pl.BlockSpec((tk, cin), xb_index))
    xr_spec = pl.BlockSpec((tm, cin), lambda i, k: (i, 0))
    w_spec = _const_spec((2, cin, cout), lambda i, k: (0, 0, 0))
    p_spec = _const_spec((3, cout), lambda i, k: (0, 0))
    scratch = [pltpu.VMEM((tm, cin), jnp.float32)]

    vmem_need = _layer_vmem_bytes(tm, tk, cin, cout, g_pad, pooled, n_k)
    vmem_limit = int(max(min(vmem_need + (16 << 20), budget), 24 << 20))

    flops = 2 * n_pad * n_pad * cin + 4 * n_pad * cin * cout
    bytes_acc = (n_pad * n_pad                                    # int8 adjacency
                 + (1 if n_k == 1 else n_rows) * n_pad * cin * 2  # A@X operand
                 + n_pad * cin * 2                                # root-term rows
                 + 2 * cin * cout * 4 + 3 * cout * 4)

    if not pooled:
        return pl.pallas_call(
            _conv_layer_kernel,
            out_shape=jax.ShapeDtypeStruct((n_pad, cout), jnp.bfloat16),
            grid=grid,
            in_specs=[a_spec, xb_spec, xr_spec, w_spec, p_spec],
            out_specs=pl.BlockSpec((tm, cout), lambda i, k: (i, 0)),
            scratch_shapes=scratch,
            compiler_params=pltpu.CompilerParams(
                dimension_semantics=("parallel", "arbitrary"),
                vmem_limit_bytes=vmem_limit),
            cost_estimate=pl.CostEstimate(
                flops=int(flops), transcendentals=int(n_pad),
                bytes_accessed=int(bytes_acc + n_pad * cout * 2)),
        )(adj_i8, xb, xr, w_stacked, pvec)

    pool_spec = pl.BlockSpec((g_pad, tm), lambda i, k: (0, i))
    partials = pl.pallas_call(
        _conv_pool_kernel,
        out_shape=jax.ShapeDtypeStruct((n_rows, g_pad, cout), jnp.float32),
        grid=grid,
        in_specs=[a_spec, xb_spec, xr_spec, w_spec, p_spec, pool_spec],
        out_specs=pl.BlockSpec((1, g_pad, cout), lambda i, k: (i, 0, 0)),
        scratch_shapes=scratch,
        compiler_params=pltpu.CompilerParams(
            dimension_semantics=("parallel", "arbitrary"),
            vmem_limit_bytes=vmem_limit),
        cost_estimate=pl.CostEstimate(
            flops=int(flops + 2 * g_pad * n_pad * cout),
            transcendentals=int(n_pad),
            bytes_accessed=int(bytes_acc + g_pad * n_pad * 4
                               + n_rows * g_pad * cout * 4)),
    )(adj_i8, xb, xr, w_stacked, pvec, pool)
    # Combine per-row-tile partial pools (keeps the row axis "parallel").
    return jnp.sum(partials, axis=0)


def _build_adjacency_int8(dst, src, n_pad):
    """Dense adjacency for 'add' aggregation: A[i, j] = #edges (j -> i).

    Built directly in int8 (exact for edge multiplicity <= 127) to avoid any
    f32 N^2 materialization or cast pass.
    """
    try:
        ones = jnp.ones(dst.shape, jnp.int8)
        adj = jnp.zeros((n_pad, n_pad), jnp.int8).at[dst, src].add(ones)
        return jax.block_until_ready(adj)
    except Exception:
        # Fallback if int8 scatter-add is unsupported on this backend.
        return (jnp.zeros((n_pad, n_pad), jnp.int32)
                .at[dst, src].add(1).astype(jnp.int8))


def gcn_embedding_forward(x, edge_index, batch, params, num_graphs):
    """x: (N, 9) f32, edge_index: (2, E) i32, batch: (N,) i32 -> (num_graphs, 256)."""
    n = x.shape[0]
    n_pad = _round_up(max(n, 1), 128)
    g_pad = _round_up(max(num_graphs, 1), 8)
    budget = _vmem_budget_bytes()

    src = edge_index[0]
    dst = edge_index[1]
    adj = _build_adjacency_int8(dst, src, n_pad)

    # global_mean_pool matrix, padded rows/cols zero: P[g, n] = 1/|graph g|.
    batch_pad = jnp.full((n_pad,), -1, jnp.int32).at[:n].set(batch.astype(jnp.int32))
    one_hot = (batch_pad[None, :]
               == jnp.arange(g_pad, dtype=jnp.int32)[:, None]).astype(jnp.float32)
    counts = jnp.maximum(jnp.sum(one_hot, axis=1, keepdims=True), 1.0)
    pool = one_hot / counts                                       # (g_pad, n_pad)

    # Layer 0: fold W_rel / W_root into X outside the kernel (associativity:
    # (A@X)@W = A@(X@W)).  The kernel then sees N x 32 bf16 operands and
    # identity "weights" -- no 9 -> 128 lane padding, 4x smaller activation.
    w_rel0, b_rel0, w_root0, ln_w0, ln_b0 = params[0]
    c0 = w_rel0.shape[1]
    x_pad = jnp.zeros((n_pad, x.shape[1]), jnp.float32).at[:n].set(x)
    xb0 = (x_pad @ w_rel0).astype(jnp.bfloat16)
    xr0 = (x_pad @ w_root0).astype(jnp.bfloat16)
    eye0 = jnp.eye(c0, dtype=jnp.float32)
    w0 = jnp.stack([eye0, eye0])
    p0 = jnp.concatenate([b_rel0.reshape(1, c0), ln_w0.reshape(1, c0),
                          ln_b0.reshape(1, c0)], axis=0)
    h = _call_conv_layer(adj, xb0, xr0, w0, p0, budget=budget)

    pooled = None
    for li in range(1, 4):
        w_rel, b_rel, w_root, ln_w, ln_b = params[li]
        cout = w_rel.shape[1]
        w = jnp.stack([w_rel, w_root])
        pvec = jnp.concatenate([b_rel.reshape(1, cout), ln_w.reshape(1, cout),
                                ln_b.reshape(1, cout)], axis=0)
        if li < 3:
            h = _call_conv_layer(adj, h, h, w, pvec, budget=budget)
        else:
            pooled = _call_conv_layer(adj, h, h, w, pvec, budget=budget, pool=pool)
    return pooled[:num_graphs]


# ------------------------------- test harness ------------------------------- #

def init_params(key):
    """Synthetic params. Each layer: (w_rel, b_rel, w_root, ln_w, ln_b)."""
    params = []
    for li in range(4):
        cin, cout = DIMS[li], DIMS[li + 1]
        k1, k2, k3, key = jax.random.split(key, 4)
        scale = 1.0 / jnp.sqrt(jnp.float32(cin))
        w_rel = jax.random.uniform(k1, (cin, cout), jnp.float32, -scale, scale)
        w_root = jax.random.uniform(k2, (cin, cout), jnp.float32, -scale, scale)
        b_rel = jax.random.uniform(k3, (1, cout), jnp.float32, -scale, scale)
        ln_w = jnp.ones((1, cout), jnp.float32)
        ln_b = jnp.zeros((1, cout), jnp.float32)
        params.append((w_rel, b_rel, w_root, ln_w, ln_b))
    return params


def reference_forward(x, edge_index, batch, params, num_graphs,
                      match_kernel_precision=False):
    """Pure-JAX reference.  If match_kernel_precision, mirrors the kernel's
    bf16 adjacency / bf16 activations / folded layer 0; otherwise full f32."""
    adj = jnp.zeros((x.shape[0],) * 2, jnp.float32).at[edge_index[1], edge_index[0]].add(1.0)
    adj_m = adj.astype(jnp.bfloat16)
    h = x
    for li, (w_rel, b_rel, w_root, ln_w, ln_b) in enumerate(params):
        if match_kernel_precision:
            if li == 0:
                xb = (h @ w_rel).astype(jnp.bfloat16)
                xr = (h @ w_root).astype(jnp.bfloat16)
                y = (jnp.dot(adj_m, xb, preferred_element_type=jnp.float32)
                     + xr.astype(jnp.float32) + b_rel)
            else:
                hb = h.astype(jnp.bfloat16)
                agg = jnp.dot(adj_m, hb, preferred_element_type=jnp.float32)
                y = agg @ w_rel + hb.astype(jnp.float32) @ w_root + b_rel
        else:
            y = (adj @ h) @ w_rel + b_rel + h @ w_root
        mu = jnp.mean(y, -1, keepdims=True)
        var = jnp.mean((y - mu) ** 2, -1, keepdims=True)
        y = (y - mu) / jnp.sqrt(var + LN_EPS) * ln_w + ln_b
        h = jnp.maximum(y, 0.0)
        if match_kernel_precision and li < 3:
            h = h.astype(jnp.bfloat16).astype(jnp.float32)
    one_hot = (batch[None, :] == jnp.arange(num_graphs)[:, None]).astype(jnp.float32)
    counts = jnp.maximum(one_hot.sum(1, keepdims=True), 1.0)
    return (one_hot / counts) @ h


if __name__ == "__main__":
    key = jax.random.PRNGKey(0)
    k_x, k_e, k_p = jax.random.split(key, 3)

    num_nodes = 16
    num_graphs = 2
    num_edges = 24

    x = jax.random.normal(k_x, (num_nodes, FEATURE_NODE_DIM), jnp.float32)
    edge_index = jax.random.randint(k_e, (2, num_edges), 0, num_nodes, jnp.int32)
    batch = jnp.concatenate(
        [jnp.zeros((num_nodes // 2,), jnp.int32),
         jnp.ones((num_nodes - num_nodes // 2,), jnp.int32)])

    params = init_params(k_p)

    out = gcn_embedding_forward(x, edge_index, batch, params, num_graphs)
    out = jax.block_until_ready(out)
    assert out.shape == (num_graphs, 256), out.shape

    ref_matched = reference_forward(x, edge_index, batch, params, num_graphs, True)
    ref_exact = reference_forward(x, edge_index, batch, params, num_graphs, False)
    err_m = float(jnp.max(jnp.abs(out - ref_matched)))
    err_e = float(jnp.max(jnp.abs(out - ref_exact)))
    assert err_m < 2e-3, err_m
    assert err_e < 5e-2, err_e

    print("KERNEL_OK")
</pallas_src>

<mosaic_0001>
module attributes {stable_mosaic.version = 11 : i64} {
  func.func @_conv_layer_kernel(%arg0: i32, %arg1: i32, %arg2: memref<128x128xi8, #tpu.memory_space<vmem>>, %arg3: memref<128x32xbf16, #tpu.memory_space<vmem>>, %arg4: memref<128x32xbf16, #tpu.memory_space<vmem>>, %arg5: memref<2x32x32xf32, #tpu.memory_space<vmem>>, %arg6: memref<3x32xf32, #tpu.memory_space<vmem>>, %arg7: memref<128x32xbf16, #tpu.memory_space<vmem>>, %arg8: memref<128x32xf32, #tpu.memory_space<vmem>>) attributes {dimension_semantics = [#tpu.dimension_semantics<parallel>, #tpu.dimension_semantics<arbitrary>], iteration_bounds = array<i64: 1, 1>, scalar_prefetch = 0 : i64, scratch_operands = 1 : i64, tpu.core_type = #tpu.core_type<tc>, window_params = [{transform_indices = @transform_0, window_bounds = array<i64: 128, 128>}, {pipeline_mode = #tpu.pipeline_mode<synchronous>, transform_indices = @transform_1, window_bounds = array<i64: 128, 32>}, {transform_indices = @transform_2, window_bounds = array<i64: 128, 32>}, {pipeline_mode = #tpu.pipeline_mode<synchronous>, transform_indices = @transform_3, window_bounds = array<i64: 2, 32, 32>}, {pipeline_mode = #tpu.pipeline_mode<synchronous>, transform_indices = @transform_4, window_bounds = array<i64: 3, 32>}, {transform_indices = @transform_5, window_bounds = array<i64: 128, 32>}]} {
    %c0_i32 = arith.constant 0 : i32
    %0 = arith.cmpi eq, %arg1, %c0_i32 : i32
    %1 = arith.extui %0 : i1 to i32
    %c0_i32_0 = arith.constant 0 : i32
    %2 = arith.cmpi ne, %1, %c0_i32_0 : i32
    scf.if %2 {
      %cst_10 = arith.constant 0.000000e+00 : f32
      %14 = vector.broadcast %cst_10 : f32 to vector<128x32xf32>
      %c0_11 = arith.constant 0 : index
      %c0_12 = arith.constant 0 : index
      %15 = vector.load %arg8[%c0_11, %c0_12] : memref<128x32xf32, #tpu.memory_space<vmem>>, vector<128x32xf32>
      tpu.vector_store %arg8[%c0_11, %c0_12], %14 {strides = array<i32>} : memref<128x32xf32, #tpu.memory_space<vmem>>, vector<128x32xf32>,
    } else {
    }
    %c0 = arith.constant 0 : index
    %c0_1 = arith.constant 0 : index
    %3 = vector.load %arg2[%c0, %c0_1] : memref<128x128xi8, #tpu.memory_space<vmem>>, vector<128x128xi8>
    %4 = arith.sitofp %3 : vector<128x128xi8> to vector<128x128xf32>
    %5 = arith.truncf %4 : vector<128x128xf32> to vector<128x128xbf16>
    %c0_2 = arith.constant 0 : index
    %c0_3 = arith.constant 0 : index
    %6 = vector.load %arg8[%c0_2, %c0_3] : memref<128x32xf32, #tpu.memory_space<vmem>>, vector<128x32xf32>
    %c0_4 = arith.constant 0 : index
    %c0_5 = arith.constant 0 : index
    %7 = vector.load %arg3[%c0_4, %c0_5] : memref<128x32xbf16, #tpu.memory_space<vmem>>, vector<128x32xbf16>
    %cst = arith.constant dense<0.000000e+00> : vector<128x32xf32>
    %8 = tpu.matmul %5, %7, %cst {dimension_numbers = #tpu.dot_dimension_numbers<[1], [0], [0], [1], [0, 0, 1, 1], [], []>} : vector<128x128xbf16>, vector<128x32xbf16>, vector<128x32xf32> -> vector<128x32xf32>
    %9 = arith.addf %6, %8 : vector<128x32xf32>
    %c0_6 = arith.constant 0 : index
    %c0_7 = arith.constant 0 : index
    %10 = vector.load %arg8[%c0_6, %c0_7] : memref<128x32xf32, #tpu.memory_space<vmem>>, vector<128x32xf32>
    tpu.vector_store %arg8[%c0_6, %c0_7], %9 {strides = array<i32>} : memref<128x32xf32, #tpu.memory_space<vmem>>, vector<128x32xf32>,
    %c0_i32_8 = arith.constant 0 : i32
    %11 = arith.cmpi eq, %arg1, %c0_i32_8 : i32
    %12 = arith.extui %11 : i1 to i32
    %c0_i32_9 = arith.constant 0 : i32
    %13 = arith.cmpi ne, %12, %c0_i32_9 : i32
    scf.if %13 {
      %c0_10 = arith.constant 0 : index
      %c0_11 = arith.constant 0 : index
      %14 = vector.load %arg8[%c0_10, %c0_11] : memref<128x32xf32, #tpu.memory_space<vmem>>, vector<128x32xf32>
      %c0_12 = arith.constant 0 : index
      %c0_13 = arith.constant 0 : index
      %c0_14 = arith.constant 0 : index
      %15 = vector.load %arg5[%c0_12, %c0_13, %c0_14] : memref<2x32x32xf32, #tpu.memory_space<vmem>>, vector<1x32x32xf32>
      %16 = vector.shape_cast %15 : vector<1x32x32xf32> to vector<32x32xf32>
      %cst_15 = arith.constant dense<0.000000e+00> : vector<128x32xf32>
      %17 = tpu.matmul %14, %16, %cst_15 {dimension_numbers = #tpu.dot_dimension_numbers<[1], [0], [0], [1], [0, 0, 1, 1], [], []>} : vector<128x32xf32>, vector<32x32xf32>, vector<128x32xf32> -> vector<128x32xf32>
      %c0_16 = arith.constant 0 : index
      %c0_17 = arith.constant 0 : index
      %18 = vector.load %arg4[%c0_16, %c0_17] : memref<128x32xbf16, #tpu.memory_space<vmem>>, vector<128x32xbf16>
      %19 = arith.extf %18 : vector<128x32xbf16> to vector<128x32xf32>
      %c1 = arith.constant 1 : index
      %c0_18 = arith.constant 0 : index
      %c0_19 = arith.constant 0 : index
      %20 = vector.load %arg5[%c1, %c0_18, %c0_19] : memref<2x32x32xf32, #tpu.memory_space<vmem>>, vector<1x32x32xf32>
      %21 = vector.shape_cast %20 : vector<1x32x32xf32> to vector<32x32xf32>
      %cst_20 = arith.constant dense<0.000000e+00> : vector<128x32xf32>
      %22 = tpu.matmul %19, %21, %cst_20 {dimension_numbers = #tpu.dot_dimension_numbers<[1], [0], [0], [1], [0, 0, 1, 1], [], []>} : vector<128x32xf32>, vector<32x32xf32>, vector<128x32xf32> -> vector<128x32xf32>
      %23 = arith.addf %17, %22 : vector<128x32xf32>
      %c0_21 = arith.constant 0 : index
      %c0_22 = arith.constant 0 : index
      %24 = vector.load %arg6[%c0_21, %c0_22] : memref<3x32xf32, #tpu.memory_space<vmem>>, vector<1x32xf32>
      %25 = vector.broadcast %24 : vector<1x32xf32> to vector<128x32xf32>
      %26 = arith.addf %23, %25 : vector<128x32xf32>
      %c1_23 = arith.constant 1 : index
      %c0_24 = arith.constant 0 : index
      %27 = vector.load %arg6[%c1_23, %c0_24] : memref<3x32xf32, #tpu.memory_space<vmem>>, vector<1x32xf32>
      %c2 = arith.constant 2 : index
      %c0_25 = arith.constant 0 : index
      %28 = vector.load %arg6[%c2, %c0_25] : memref<3x32xf32, #tpu.memory_space<vmem>>, vector<1x32xf32>
      %cst_26 = arith.constant dense<0.000000e+00> : vector<128xf32>
      %29 = vector.multi_reduction <add>, %26, %cst_26 [1] : vector<128x32xf32> to vector<128xf32>
      %30 = vector.shape_cast %29 : vector<128xf32> to vector<128x1xf32>
      %cst_27 = arith.constant 3.200000e+01 : f32
      %31 = vector.broadcast %cst_27 : f32 to vector<128x1xf32>
      %32 = arith.divf %30, %31 : vector<128x1xf32>
      %33 = vector.broadcast %32 : vector<128x1xf32> to vector<128x32xf32>
      %34 = arith.subf %26, %33 : vector<128x32xf32>
      %35 = arith.mulf %34, %34 : vector<128x32xf32>
      %cst_28 = arith.constant dense<0.000000e+00> : vector<128xf32>
      %36 = vector.multi_reduction <add>, %35, %cst_28 [1] : vector<128x32xf32> to vector<128xf32>
      %37 = vector.shape_cast %36 : vector<128xf32> to vector<128x1xf32>
      %cst_29 = arith.constant 3.200000e+01 : f32
      %38 = vector.broadcast %cst_29 : f32 to vector<128x1xf32>
      %39 = arith.divf %37, %38 : vector<128x1xf32>
      %cst_30 = arith.constant 9.99999974E-6 : f32
      %40 = vector.broadcast %cst_30 : f32 to vector<128x1xf32>
      %41 = arith.addf %39, %40 : vector<128x1xf32>
      %42 = math.rsqrt %41 : vector<128x1xf32>
      %43 = vector.broadcast %42 : vector<128x1xf32> to vector<128x32xf32>
      %44 = arith.mulf %34, %43 : vector<128x32xf32>
      %45 = vector.broadcast %27 : vector<1x32xf32> to vector<128x32xf32>
      %46 = arith.mulf %44, %45 : vector<128x32xf32>
      %47 = vector.broadcast %28 : vector<1x32xf32> to vector<128x32xf32>
      %48 = arith.addf %46, %47 : vector<128x32xf32>
      %cst_31 = arith.constant 0.000000e+00 : f32
      %49 = vector.broadcast %cst_31 : f32 to vector<128x32xf32>
      %50 = arith.maximumf %48, %49 : vector<128x32xf32>
      %51 = arith.truncf %50 : vector<128x32xf32> to vector<128x32xbf16>
      %c0_32 = arith.constant 0 : index
      %c0_33 = arith.constant 0 : index
      %52 = vector.load %arg7[%c0_32, %c0_33] : memref<128x32xbf16, #tpu.memory_space<vmem>>, vector<128x32xbf16>
      tpu.vector_store %arg7[%c0_32, %c0_33], %51 {strides = array<i32>} : memref<128x32xbf16, #tpu.memory_space<vmem>>, vector<128x32xbf16>,
    } else {
    }
    return
  }
  func.func @transform_0(%arg0: i32, %arg1: i32) -> (i32, i32) {
    %c0_i32 = arith.constant 0 : i32
    return %arg0, %arg1 : i32, i32
  }
  func.func @transform_1(%arg0: i32, %arg1: i32) -> (i32, i32) {
    %c0_i32 = arith.constant 0 : i32
    %c0_i32_0 = arith.constant 0 : i32
    return %arg1, %c0_i32 : i32, i32
  }
  func.func @transform_2(%arg0: i32, %arg1: i32) -> (i32, i32) {
    %c0_i32 = arith.constant 0 : i32
    %c0_i32_0 = arith.constant 0 : i32
    return %arg0, %c0_i32 : i32, i32
  }
  func.func @transform_3(%arg0: i32, %arg1: i32) -> (i32, i32, i32) {
    %c0_i32 = arith.constant 0 : i32
    %c0_i32_0 = arith.constant 0 : i32
    %c0_i32_1 = arith.constant 0 : i32
    %c0_i32_2 = arith.constant 0 : i32
    return %c0_i32, %c0_i32_0, %c0_i32_1 : i32, i32, i32
  }
  func.func @transform_4(%arg0: i32, %arg1: i32) -> (i32, i32) {
    %c0_i32 = arith.constant 0 : i32
    %c0_i32_0 = arith.constant 0 : i32
    %c0_i32_1 = arith.constant 0 : i32
    return %c0_i32, %c0_i32_0 : i32, i32
  }
  func.func @transform_5(%arg0: i32, %arg1: i32) -> (i32, i32) {
    %c0_i32 = arith.constant 0 : i32
    %c0_i32_0 = arith.constant 0 : i32
    return %arg0, %c0_i32 : i32, i32
  }
}

</mosaic_0001>

<llo_original>
// kernel: tpu_custom_call.1
$region0: #{tpu_custom_call.1}
  #allocation0 [shape = 'u32[]', space=smem, size = 0x4, offset = 0x4, fixed_abs, tag = 'smem constant byte address 0x4 - core index']
  #allocation1 [shape = 'u32[144,128]{1,0:T(1,128)}', space=vmem, size = 0x12000, scoped, tag = 'internal scratch']
  #allocation2 [shape = 'f32[128,32]{1,0:T(8,128)}', space=vmem, size = 0x10000, scoped, tag = 'scratch operand']
  %s0 = inlined_call_operand.vmem [shape: s8[128,128], index: 0, kind: input, shape index: {}]
  %s1 = inlined_call_operand.vmem [shape: bf16[128,32], index: 1, kind: input, shape index: {}]
  %s2 = inlined_call_operand.vmem [shape: bf16[128,32], index: 2, kind: input, shape index: {}]
  %s3 = inlined_call_operand.vmem [shape: f32[2,32,32], index: 3, kind: input, shape index: {}]
  %s4 = inlined_call_operand.vmem [shape: f32[3,32], index: 4, kind: input, shape index: {}]
  %s5 = inlined_call_operand.vmem [shape: bf16[128,32], index: 5, kind: output, shape index: {}]
  %s6 = sld [smem:[#allocation0]]
  $region38: #{tpu_custom_call.1} parent=0
    _
  %s8 = ssub.s32 1, %s6
  %s9 = scalar_select 0, %s8, %s6
  // Predicated region
  $region2: #{tpu_custom_call.1} parent=0 // pred_check
    _
  $region3: #{tpu_custom_call.1} parent=0 // pred_check_branch
    %11 = sbr.rel (0) target = $region5
  $region4: #{tpu_custom_call.1} parent=0 // pred_region
    _
  $region5: #{tpu_custom_call.1} parent=0 // pred_fallthru
    _
  // Predicated region
  $region6: #{tpu_custom_call.1} parent=0 // pred_check
    _
  $region7: #{tpu_custom_call.1} parent=0 // pred_check_branch
    %13 = sbr.rel (0) target = $region9
  $region8: #{tpu_custom_call.1} parent=0 // pred_region
    _
  $region9: #{tpu_custom_call.1} parent=0 // pred_fallthru
    _
  // Predicated region
  $region10: #{tpu_custom_call.1} parent=0 // pred_check
    _
  $region11: #{tpu_custom_call.1} parent=0 // pred_check_branch
    %15 = sbr.rel (0) target = $region13
  $region12: #{tpu_custom_call.1} parent=0 // pred_region
    _
  $region13: #{tpu_custom_call.1} parent=0 // pred_fallthru
    _
  // Predicated region
  $region14: #{tpu_custom_call.1} parent=0 // pred_check
    _
  $region15: #{tpu_custom_call.1} parent=0 // pred_check_branch
    %17 = sbr.rel (0) target = $region17
  $region16: #{tpu_custom_call.1} parent=0 // pred_region
    _
  $region17: #{tpu_custom_call.1} parent=0 // pred_fallthru
    _
  // Predicated region
  $region18: #{tpu_custom_call.1} parent=0 // pred_check
    _
  $region19: #{tpu_custom_call.1} parent=0 // pred_check_branch
    %19 = sbr.rel (0) target = $region21
  $region20: #{tpu_custom_call.1} parent=0 // pred_region
    _
  $region21: #{tpu_custom_call.1} parent=0 // pred_fallthru
    _
  %p21 = scmp.eq.s32.totalorder 0, 0
  // Predicated region
  $region22: #{tpu_custom_call.1} parent=0 // pred_check
    %p22 = pneg %p21
  $region23: #{tpu_custom_call.1} parent=0 // pred_check_branch
    %24 = sbr.rel (%p22) target = $region25
  $region24: #{tpu_custom_call.1} parent=0 // pred_region
    %vm25 = vcmask 261120
    %26 = vst.msk [vmem:[#allocation2] sm:$0xff] %vm25, 0.0
    %27 = vst.msk [vmem:[#allocation2 + $0x8] sm:$0xff] %vm25, 0.0
    %28 = vst.msk [vmem:[#allocation2 + $0x10] sm:$0xff] %vm25, 0.0
    %29 = vst.msk [vmem:[#allocation2 + $0x18] sm:$0xff] %vm25, 0.0
    %30 = vst.msk [vmem:[#allocation2 + $0x20] sm:$0xff] %vm25, 0.0
    %31 = vst.msk [vmem:[#allocation2 + $0x28] sm:$0xff] %vm25, 0.0
    %32 = vst.msk [vmem:[#allocation2 + $0x30] sm:$0xff] %vm25, 0.0
    %33 = vst.msk [vmem:[#allocation2 + $0x38] sm:$0xff] %vm25, 0.0
    %34 = vst.msk [vmem:[#allocation2 + $0x40] sm:$0xff] %vm25, 0.0
    %35 = vst.msk [vmem:[#allocation2 + $0x48] sm:$0xff] %vm25, 0.0
    %36 = vst.msk [vmem:[#allocation2 + $0x50] sm:$0xff] %vm25, 0.0
    %37 = vst.msk [vmem:[#allocation2 + $0x58] sm:$0xff] %vm25, 0.0
    %38 = vst.msk [vmem:[#allocation2 + $0x60] sm:$0xff] %vm25, 0.0
    %39 = vst.msk [vmem:[#allocation2 + $0x68] sm:$0xff] %vm25, 0.0
    %40 = vst.msk [vmem:[#allocation2 + $0x70] sm:$0xff] %vm25, 0.0
    %41 = vst.msk [vmem:[#allocation2 + $0x78] sm:$0xff] %vm25, 0.0
  $region25: #{tpu_custom_call.1} parent=0 // pred_fallthru
    _
  %v42 = vld [vmem:[%s0] sm:$0xff]
  %v43 = vld [vmem:[%s0 + $0x8] sm:$0xff]
  %v44 = vld [vmem:[%s0 + $0x10] sm:$0xff]
  %v45 = vld [vmem:[%s0 + $0x18] sm:$0xff]
  %v46 = vunpack.c.l.s8.bf16 %v42
  %v47 = vunpack.c.h.s8.bf16 %v42
  %v48 = vunpack.c.l.s8.bf16 %v43
  %v49 = vunpack.c.h.s8.bf16 %v43
  %v50 = vunpack.c.l.s8.bf16 %v44
  %v51 = vunpack.c.h.s8.bf16 %v44
  %v52 = vunpack.c.l.s8.bf16 %v45
  %v53 = vunpack.c.h.s8.bf16 %v45
  %v54 = vld [vmem:[#allocation2] sm:$0xff]
  %v55 = vld [vmem:[#allocation2 + $0x8] sm:$0xff]
  %v56 = vld [vmem:[#allocation2 + $0x10] sm:$0xff]
  %v57 = vld [vmem:[#allocation2 + $0x18] sm:$0xff]
  %v58 = vld [vmem:[#allocation2 + $0x20] sm:$0xff]
  %v59 = vld [vmem:[#allocation2 + $0x28] sm:$0xff]
  %v60 = vld [vmem:[#allocation2 + $0x30] sm:$0xff]
  %v61 = vld [vmem:[#allocation2 + $0x38] sm:$0xff]
  %v62 = vld [vmem:[#allocation2 + $0x40] sm:$0xff]
  %v63 = vld [vmem:[#allocation2 + $0x48] sm:$0xff]
  %v64 = vld [vmem:[#allocation2 + $0x50] sm:$0xff]
  %v65 = vld [vmem:[#allocation2 + $0x58] sm:$0xff]
  %v66 = vld [vmem:[#allocation2 + $0x60] sm:$0xff]
  %v67 = vld [vmem:[#allocation2 + $0x68] sm:$0xff]
  %v68 = vld [vmem:[#allocation2 + $0x70] sm:$0xff]
  %v69 = vld [vmem:[#allocation2 + $0x78] sm:$0xff]
  %v70 = vld [vmem:[%s1] sm:$0xf]
  %v71 = vld [vmem:[%s1 + $0x4] sm:$0xf]
  %v72 = vld [vmem:[%s1 + $0x8] sm:$0xf]
  %v73 = vld [vmem:[%s1 + $0xc] sm:$0xf]
  %v74 = vld [vmem:[%s1 + $0x10] sm:$0xf]
  %v75 = vld [vmem:[%s1 + $0x14] sm:$0xf]
  %v76 = vld [vmem:[%s1 + $0x18] sm:$0xf]
  %v77 = vld [vmem:[%s1 + $0x1c] sm:$0xf]
  %v78 = vld [vmem:[%s1 + $0x20] sm:$0xf]
  %v79 = vld [vmem:[%s1 + $0x24] sm:$0xf]
  %v80 = vld [vmem:[%s1 + $0x28] sm:$0xf]
  %v81 = vld [vmem:[%s1 + $0x2c] sm:$0xf]
  %v82 = vld [vmem:[%s1 + $0x30] sm:$0xf]
  %v83 = vld [vmem:[%s1 + $0x34] sm:$0xf]
  %v84 = vld [vmem:[%s1 + $0x38] sm:$0xf]
  %v85 = vld [vmem:[%s1 + $0x3c] sm:$0xf]
  %v102 = vunpack.c.l.b16 %v70
  %v103 = vunpack.c.l.b16 %v71
  %v104 = vunpack.c.l.b16 %v72
  %v105 = vunpack.c.l.b16 %v73
  %v106 = vunpack.c.l.b16 %v74
  %v107 = vunpack.c.l.b16 %v75
  %v108 = vunpack.c.l.b16 %v76
  %v109 = vunpack.c.l.b16 %v77
  %v110 = vunpack.c.l.b16 %v78
  %v111 = vunpack.c.l.b16 %v79
  %v112 = vunpack.c.l.b16 %v80
  %v113 = vunpack.c.l.b16 %v81
  %v114 = vunpack.c.l.b16 %v82
  %v115 = vunpack.c.l.b16 %v83
  %v116 = vunpack.c.l.b16 %v84
  %v117 = vunpack.c.l.b16 %v85
  %v118 = vpack.c.b16 %v103, %v102
  %v119 = vpack.c.b16 %v105, %v104
  %v120 = vpack.c.b16 %v107, %v106
  %v121 = vpack.c.b16 %v109, %v108
  %v122 = vpack.c.b16 %v111, %v110
  %v123 = vpack.c.b16 %v113, %v112
  %v124 = vpack.c.b16 %v115, %v114
  %v125 = vpack.c.b16 %v117, %v116
  %134 = vmatprep.subr.bf16.mxu0 0
  %135 = vmatpush1.bf16.msra.mxu0 %v125
  %136 = vmatprep.subr.bf16.mxu0 0
  %137 = vmatpush1.bf16.msra.mxu0 %v124
  %138 = vmatprep.subr.bf16.mxu0 0
  %139 = vmatpush1.bf16.msra.mxu0 %v123
  %140 = vmatprep.subr.bf16.mxu0 0
  %141 = vmatpush1.bf16.msra.mxu0 %v122
  %142 = vmatprep.subr.bf16.mxu0 0
  %143 = vmatpush1.bf16.msra.mxu0 %v121
  %144 = vmatprep.subr.bf16.mxu0 0
  %145 = vmatpush1.bf16.msra.mxu0 %v120
  %146 = vmatprep.subr.bf16.mxu0 0
  %147 = vmatpush1.bf16.msra.mxu0 %v119
  %148 = vmatprep.subr.bf16.mxu0 0
  %149 = vmatpush1.bf16.msra.mxu0 %v118
  %150 = vmatprep.subr.bf16.mxu0 0
  %151 = vmatpush2.bf16.msra.mxu0 0
  %152 = vmatprep.subr.bf16.mxu0 0
  %153 = vmatpush2.bf16.msra.mxu0 0
  %154 = vmatprep.subr.bf16.mxu0 0
  %155 = vmatpush2.bf16.msra.mxu0 0
  %156 = vmatprep.subr.bf16.mxu0 0
  %157 = vmatpush2.bf16.msra.mxu0 0
  %158 = vmatprep.subr.bf16.mxu0 0
  %159 = vmatpush2.bf16.msra.mxu0 0
  %160 = vmatprep.subr.bf16.mxu0 0
  %161 = vmatpush2.bf16.msra.mxu0 0
  %162 = vmatprep.subr.bf16.mxu0 0
  %163 = vmatpush2.bf16.msra.mxu0 0
  %164 = vmatprep.subr.bf16.mxu0 0
  %165 = vmatpush2.bf16.msra.mxu0 0
  %166 = vmatprep.mubr.bf16.mxu0 0
  %167 = vmatmul.mubr.bf16.gmra.mxu0 %v46
  %v168 = vpop.f32.mrf.mxu0
  %v169 = vadd.f32 0.0, %v168
  %v170 = vpop.f32.mrf.mxu0
  %v171 = vpop.f32.mrf.mxu0
  %v172 = vadd.f32 0.0, %v171
  %v173 = vpop.f32.mrf.mxu0
  %174 = vmatprep.mubr.bf16.mxu0 0
  %175 = vmatmul.mubr.bf16.gmra.mxu0 %v47
  %v176 = vpop.f32.mrf.mxu0
  %v177 = vadd.f32 0.0, %v176
  %v178 = vpop.f32.mrf.mxu0
  %v179 = vpop.f32.mrf.mxu0
  %v180 = vadd.f32 0.0, %v179
  %v181 = vpop.f32.mrf.mxu0
  %182 = vmatprep.mubr.bf16.mxu0 0
  %183 = vmatmul.mubr.bf16.gmra.mxu0 %v48
  %v184 = vpop.f32.mrf.mxu0
  %v185 = vadd.f32 0.0, %v184
  %v186 = vpop.f32.mrf.mxu0
  %v187 = vpop.f32.mrf.mxu0
  %v188 = vadd.f32 0.0, %v187
  %v189 = vpop.f32.mrf.mxu0
  %190 = vmatprep.mubr.bf16.mxu0 0
  %191 = vmatmul.mubr.bf16.gmra.mxu0 %v49
  %v192 = vpop.f32.mrf.mxu0
  %v193 = vadd.f32 0.0, %v192
  %v194 = vpop.f32.mrf.mxu0
  %v195 = vpop.f32.mrf.mxu0
  %v196 = vadd.f32 0.0, %v195
  %v197 = vpop.f32.mrf.mxu0
  %198 = vmatprep.mubr.bf16.mxu0 0
  %199 = vmatmul.mubr.bf16.gmra.mxu0 %v50
  %v200 = vpop.f32.mrf.mxu0
  %v201 = vadd.f32 0.0, %v200
  %v202 = vpop.f32.mrf.mxu0
  %v203 = vpop.f32.mrf.mxu0
  %v204 = vadd.f32 0.0, %v203
  %v205 = vpop.f32.mrf.mxu0
  %206 = vmatprep.mubr.bf16.mxu0 0
  %207 = vmatmul.mubr.bf16.gmra.mxu0 %v51
  %v208 = vpop.f32.mrf.mxu0
  %v209 = vadd.f32 0.0, %v208
  %v210 = vpop.f32.mrf.mxu0
  %v211 = vpop.f32.mrf.mxu0
  %v212 = vadd.f32 0.0, %v211
  %v213 = vpop.f32.mrf.mxu0
  %214 = vmatprep.mubr.bf16.mxu0 0
  %215 = vmatmul.mubr.bf16.gmra.mxu0 %v52
  %v216 = vpop.f32.mrf.mxu0
  %v217 = vadd.f32 0.0, %v216
  %v218 = vpop.f32.mrf.mxu0
  %v219 = vpop.f32.mrf.mxu0
  %v220 = vadd.f32 0.0, %v219
  %v221 = vpop.f32.mrf.mxu0
  %222 = vmatprep.mubr.bf16.mxu0 0
  %223 = vmatmul.mubr.bf16.gmra.mxu0 %v53
  %v224 = vpop.f32.mrf.mxu0
  %v225 = vadd.f32 0.0, %v224
  %v226 = vpop.f32.mrf.mxu0
  %v227 = vpop.f32.mrf.mxu0
  %v228 = vadd.f32 0.0, %v227
  %v229 = vpop.f32.mrf.mxu0
  %230 = vdwg.mxu0
  %v231 = vadd.f32 %v54, %v169
  %v232 = vadd.f32 %v55, %v172
  %v233 = vadd.f32 %v56, %v177
  %v234 = vadd.f32 %v57, %v180
  %v235 = vadd.f32 %v58, %v185
  %v236 = vadd.f32 %v59, %v188
  %v237 = vadd.f32 %v60, %v193
  %v238 = vadd.f32 %v61, %v196
  %v239 = vadd.f32 %v62, %v201
  %v240 = vadd.f32 %v63, %v204
  %v241 = vadd.f32 %v64, %v209
  %v242 = vadd.f32 %v65, %v212
  %v243 = vadd.f32 %v66, %v217
  %v244 = vadd.f32 %v67, %v220
  %v245 = vadd.f32 %v68, %v225
  %v246 = vadd.f32 %v69, %v228
  %vm247 = vcmask 261120
  %248 = vst.msk [vmem:[#allocation2] sm:$0xff] %vm247, %v231
  %249 = vst.msk [vmem:[#allocation2 + $0x8] sm:$0xff] %vm247, %v232
  %250 = vst.msk [vmem:[#allocation2 + $0x10] sm:$0xff] %vm247, %v233
  %251 = vst.msk [vmem:[#allocation2 + $0x18] sm:$0xff] %vm247, %v234
  %252 = vst.msk [vmem:[#allocation2 + $0x20] sm:$0xff] %vm247, %v235
  %253 = vst.msk [vmem:[#allocation2 + $0x28] sm:$0xff] %vm247, %v236
  %254 = vst.msk [vmem:[#allocation2 + $0x30] sm:$0xff] %vm247, %v237
  %255 = vst.msk [vmem:[#allocation2 + $0x38] sm:$0xff] %vm247, %v238
  %256 = vst.msk [vmem:[#allocation2 + $0x40] sm:$0xff] %vm247, %v239
  %257 = vst.msk [vmem:[#allocation2 + $0x48] sm:$0xff] %vm247, %v240
  %258 = vst.msk [vmem:[#allocation2 + $0x50] sm:$0xff] %vm247, %v241
  %259 = vst.msk [vmem:[#allocation2 + $0x58] sm:$0xff] %vm247, %v242
  %260 = vst.msk [vmem:[#allocation2 + $0x60] sm:$0xff] %vm247, %v243
  %261 = vst.msk [vmem:[#allocation2 + $0x68] sm:$0xff] %vm247, %v244
  %262 = vst.msk [vmem:[#allocation2 + $0x70] sm:$0xff] %vm247, %v245
  %263 = vst.msk [vmem:[#allocation2 + $0x78] sm:$0xff] %vm247, %v246
  // Predicated region
  $region26: #{tpu_custom_call.1} parent=0 // pred_check
    %p264 = pneg %p21
  $region27: #{tpu_custom_call.1} parent=0 // pred_check_branch
    %266 = sbr.rel (%p264) target = $region29
  $region28: #{tpu_custom_call.1} parent=0 // pred_region
    %v267 = vld [vmem:[#allocation2] sm:$0xff]
    %v268 = vld [vmem:[#allocation2 + $0x8] sm:$0xff]
    %v269 = vld [vmem:[#allocation2 + $0x10] sm:$0xff]
    %v270 = vld [vmem:[#allocation2 + $0x18] sm:$0xff]
    %v271 = vld [vmem:[#allocation2 + $0x20] sm:$0xff]
    %v272 = vld [vmem:[#allocation2 + $0x28] sm:$0xff]
    %v273 = vld [vmem:[#allocation2 + $0x30] sm:$0xff]
    %v274 = vld [vmem:[#allocation2 + $0x38] sm:$0xff]
    %v275 = vld [vmem:[#allocation2 + $0x40] sm:$0xff]
    %v276 = vld [vmem:[#allocation2 + $0x48] sm:$0xff]
    %v277 = vld [vmem:[#allocation2 + $0x50] sm:$0xff]
    %v278 = vld [vmem:[#allocation2 + $0x58] sm:$0xff]
    %v279 = vld [vmem:[#allocation2 + $0x60] sm:$0xff]
    %v280 = vld [vmem:[#allocation2 + $0x68] sm:$0xff]
    %v281 = vld [vmem:[#allocation2 + $0x70] sm:$0xff]
    %v282 = vld [vmem:[#allocation2 + $0x78] sm:$0xff]
    %v283 = vld [vmem:[%s3] sm:$0xff]
    %v284 = vld [vmem:[%s3 + $0x8] sm:$0xff]
    %v285 = vld [vmem:[%s3 + $0x10] sm:$0xff]
    %v286 = vld [vmem:[%s3 + $0x18] sm:$0xff]
    %v287 = vld [vmem:[%s2] sm:$0xf]
    %v288 = vld [vmem:[%s2 + $0x4] sm:$0xf]
    %v289 = vld [vmem:[%s2 + $0x8] sm:$0xf]
    %v290 = vld [vmem:[%s2 + $0xc] sm:$0xf]
    %v291 = vld [vmem:[%s2 + $0x10] sm:$0xf]
    %v292 = vld [vmem:[%s2 + $0x14] sm:$0xf]
    %v293 = vld [vmem:[%s2 + $0x18] sm:$0xf]
    %v294 = vld [vmem:[%s2 + $0x1c] sm:$0xf]
    %v295 = vld [vmem:[%s2 + $0x20] sm:$0xf]
    %v296 = vld [vmem:[%s2 + $0x24] sm:$0xf]
    %v297 = vld [vmem:[%s2 + $0x28] sm:$0xf]
    %v298 = vld [vmem:[%s2 + $0x2c] sm:$0xf]
    %v299 = vld [vmem:[%s2 + $0x30] sm:$0xf]
    %v300 = vld [vmem:[%s2 + $0x34] sm:$0xf]
    %v301 = vld [vmem:[%s2 + $0x38] sm:$0xf]
    %v302 = vld [vmem:[%s2 + $0x3c] sm:$0xf]
    %v303 = vunpack.c.l.bf16 %v287
    %v304 = vunpack.c.l.bf16 %v288
    %v305 = vunpack.c.l.bf16 %v289
    %v306 = vunpack.c.l.bf16 %v290
    %v307 = vunpack.c.l.bf16 %v291
    %v308 = vunpack.c.l.bf16 %v292
    %v309 = vunpack.c.l.bf16 %v293
    %v310 = vunpack.c.l.bf16 %v294
    %v311 = vunpack.c.l.bf16 %v295
    %v312 = vunpack.c.l.bf16 %v296
    %v313 = vunpack.c.l.bf16 %v297
    %v314 = vunpack.c.l.bf16 %v298
    %v315 = vunpack.c.l.bf16 %v299
    %v316 = vunpack.c.l.bf16 %v300
    %v317 = vunpack.c.l.bf16 %v301
    %v318 = vunpack.c.l.bf16 %v302
    %s319 = scalar_lea.vmem %s3, 32
    %v320 = vld [vmem:[%s319] sm:$0xff]
    %v321 = vld [vmem:[%s319 + $0x8] sm:$0xff]
    %v322 = vld [vmem:[%s319 + $0x10] sm:$0xff]
    %v323 = vld [vmem:[%s319 + $0x18] sm:$0xff]
    %v325 = vsel %vm247, %v303, 0
    %v328 = vsel %vm247, %v304, 0
    %v331 = vsel %vm247, %v305, 0
    %v334 = vsel %vm247, %v306, 0
    %v337 = vsel %vm247, %v307, 0
    %v340 = vsel %vm247, %v308, 0
    %v343 = vsel %vm247, %v309, 0
    %v346 = vsel %vm247, %v310, 0
    %v349 = vsel %vm247, %v311, 0
    %v352 = vsel %vm247, %v312, 0
    %v355 = vsel %vm247, %v313, 0
    %v358 = vsel %vm247, %v314, 0
    %v361 = vsel %vm247, %v315, 0
    %v364 = vsel %vm247, %v316, 0
    %v367 = vsel %vm247, %v317, 0
    %v370 = vsel %vm247, %v318, 0
    %372 = vmatprep.subr.mxu0 0.0
    %373 = vmatpush1.msra.mxu0 0.0
    %374 = vmatprep.subr.mxu0 0.0
    %375 = vmatpush1.msra.mxu0 0.0
    %376 = vmatprep.subr.mxu0 0.0
    %377 = vmatpush1.msra.mxu0 0.0
    %378 = vmatprep.subr.mxu0 0.0
    %379 = vmatpush1.msra.mxu0 0.0
    %380 = vmatprep.subr.mxu0 0.0
    %381 = vmatpush1.msra.mxu0 0.0
    %382 = vmatprep.subr.mxu0 0.0
    %383 = vmatpush1.msra.mxu0 0.0
    %384 = vmatprep.subr.mxu0 0.0
    %385 = vmatpush1.msra.mxu0 0.0
    %386 = vmatprep.subr.mxu0 0.0
    %387 = vmatpush1.msra.mxu0 0.0
    %388 = vmatprep.subr.mxu0 0.0
    %389 = vmatpush1.msra.mxu0 0.0
    %390 = vmatprep.subr.mxu0 0.0
    %391 = vmatpush1.msra.mxu0 0.0
    %392 = vmatprep.subr.mxu0 0.0
    %393 = vmatpush1.msra.mxu0 0.0
    %394 = vmatprep.subr.mxu0 0.0
    %395 = vmatpush1.msra.mxu0 0.0
    %396 = vmatprep.subr.mxu0 0.0
    %397 = vmatpush1.msra.mxu0 %v323
    %398 = vmatprep.subr.mxu0 0.0
    %399 = vmatpush1.msra.mxu0 %v322
    %400 = vmatprep.subr.mxu0 0.0
    %401 = vmatpush1.msra.mxu0 %v321
    %402 = vmatprep.subr.mxu0 0.0
    %403 = vmatpush1.msra.mxu0 %v320
    %404 = vmatprep.subr.mxu0 0.0
    %405 = vmatpush2.msra.mxu0 0.0
    %406 = vmatprep.subr.mxu0 0.0
    %407 = vmatpush2.msra.mxu0 0.0
    %408 = vmatprep.subr.mxu0 0.0
    %409 = vmatpush2.msra.mxu0 0.0
    %410 = vmatprep.subr.mxu0 0.0
    %411 = vmatpush2.msra.mxu0 0.0
    %412 = vmatprep.subr.mxu0 0.0
    %413 = vmatpush2.msra.mxu0 0.0
    %414 = vmatprep.subr.mxu0 0.0
    %415 = vmatpush2.msra.mxu0 0.0
    %416 = vmatprep.subr.mxu0 0.0
    %417 = vmatpush2.msra.mxu0 0.0
    %418 = vmatprep.subr.mxu0 0.0
    %419 = vmatpush2.msra.mxu0 0.0
    %420 = vmatprep.subr.mxu0 0.0
    %421 = vmatpush2.msra.mxu0 0.0
    %422 = vmatprep.subr.mxu0 0.0
    %423 = vmatpush2.msra.mxu0 0.0
    %424 = vmatprep.subr.mxu0 0.0
    %425 = vmatpush2.msra.mxu0 0.0
    %426 = vmatprep.subr.mxu0 0.0
    %427 = vmatpush2.msra.mxu0 0.0
    %428 = vmatprep.subr.mxu0 0.0
    %429 = vmatpush2.msra.mxu0 0.0
    %430 = vmatprep.subr.mxu0 0.0
    %431 = vmatpush2.msra.mxu0 0.0
    %432 = vmatprep.subr.mxu0 0.0
    %433 = vmatpush2.msra.mxu0 0.0
    %434 = vmatprep.subr.mxu0 0.0
    %435 = vmatpush2.msra.mxu0 0.0
    %436 = vmatprep.mubr.f32.mxu0 0.0
    %437 = vmatmul.mubr.f32.gmra.mxu0 %v325
    %v438 = vpop.f32.mrf.mxu0
    %v439 = vadd.f32 0.0, %v438
    %v440 = vpop.f32.mrf.mxu0
    %441 = vmatprep.mubr.f32.mxu0 0.0
    %442 = vmatmul.mubr.f32.gmra.mxu0 %v328
    %v443 = vpop.f32.mrf.mxu0
    %v444 = vadd.f32 0.0, %v443
    %v445 = vpop.f32.mrf.mxu0
    %446 = vmatprep.mubr.f32.mxu0 0.0
    %447 = vmatmul.mubr.f32.gmra.mxu0 %v331
    %v448 = vpop.f32.mrf.mxu0
    %v449 = vadd.f32 0.0, %v448
    %v450 = vpop.f32.mrf.mxu0
    %451 = vmatprep.mubr.f32.mxu0 0.0
    %452 = vmatmul.mubr.f32.gmra.mxu0 %v334
    %v453 = vpop.f32.mrf.mxu0
    %v454 = vadd.f32 0.0, %v453
    %v455 = vpop.f32.mrf.mxu0
    %456 = vmatprep.mubr.f32.mxu0 0.0
    %457 = vmatmul.mubr.f32.gmra.mxu0 %v337
    %v458 = vpop.f32.mrf.mxu0
    %v459 = vadd.f32 0.0, %v458
    %v460 = vpop.f32.mrf.mxu0
    %461 = vmatprep.mubr.f32.mxu0 0.0
    %462 = vmatmul.mubr.f32.gmra.mxu0 %v340
    %v463 = vpop.f32.mrf.mxu0
    %v464 = vadd.f32 0.0, %v463
    %v465 = vpop.f32.mrf.mxu0
    %466 = vmatprep.mubr.f32.mxu0 0.0
    %467 = vmatmul.mubr.f32.gmra.mxu0 %v343
    %v468 = vpop.f32.mrf.mxu0
    %v469 = vadd.f32 0.0, %v468
    %v470 = vpop.f32.mrf.mxu0
    %471 = vmatprep.mubr.f32.mxu0 0.0
    %472 = vmatmul.mubr.f32.gmra.mxu0 %v346
    %v473 = vpop.f32.mrf.mxu0
    %v474 = vadd.f32 0.0, %v473
    %v475 = vpop.f32.mrf.mxu0
    %476 = vmatprep.mubr.f32.mxu0 0.0
    %477 = vmatmul.mubr.f32.gmra.mxu0 %v349
    %v478 = vpop.f32.mrf.mxu0
    %v479 = vadd.f32 0.0, %v478
    %v480 = vpop.f32.mrf.mxu0
    %481 = vmatprep.mubr.f32.mxu0 0.0
    %482 = vmatmul.mubr.f32.gmra.mxu0 %v352
    %v483 = vpop.f32.mrf.mxu0
    %v484 = vadd.f32 0.0, %v483
    %v485 = vpop.f32.mrf.mxu0
    %486 = vmatprep.mubr.f32.mxu0 0.0
    %487 = vmatmul.mubr.f32.gmra.mxu0 %v355
    %v488 = vpop.f32.mrf.mxu0
    %v489 = vadd.f32 0.0, %v488
    %v490 = vpop.f32.mrf.mxu0
    %491 = vmatprep.mubr.f32.mxu0 0.0
    %492 = vmatmul.mubr.f32.gmra.mxu0 %v358
    %v493 = vpop.f32.mrf.mxu0
    %v494 = vadd.f32 0.0, %v493
    %v495 = vpop.f32.mrf.mxu0
    %496 = vmatprep.mubr.f32.mxu0 0.0
    %497 = vmatmul.mubr.f32.gmra.mxu0 %v361
    %v498 = vpop.f32.mrf.mxu0
    %v499 = vadd.f32 0.0, %v498
    %v500 = vpop.f32.mrf.mxu0
    %501 = vmatprep.mubr.f32.mxu0 0.0
    %502 = vmatmul.mubr.f32.gmra.mxu0 %v364
    %v503 = vpop.f32.mrf.mxu0
    %v504 = vadd.f32 0.0, %v503
    %v505 = vpop.f32.mrf.mxu0
    %506 = vmatprep.mubr.f32.mxu0 0.0
    %507 = vmatmul.mubr.f32.gmra.mxu0 %v367
    %v508 = vpop.f32.mrf.mxu0
    %v509 = vadd.f32 0.0, %v508
    %v510 = vpop.f32.mrf.mxu0
    %511 = vmatprep.mubr.f32.mxu0 0.0
    %512 = vmatmul.mubr.f32.gmra.mxu0 %v370
    %v513 = vpop.f32.mrf.mxu0
    %v514 = vadd.f32 0.0, %v513
    %v515 = vpop.f32.mrf.mxu0
    %516 = vdwg.mxu0
    %v518 = vsel %vm247, %v267, 0
    %v521 = vsel %vm247, %v268, 0
    %v524 = vsel %vm247, %v269, 0
    %v527 = vsel %vm247, %v270, 0
    %v530 = vsel %vm247, %v271, 0
    %v533 = vsel %vm247, %v272, 0
    %v536 = vsel %vm247, %v273, 0
    %v539 = vsel %vm247, %v274, 0
    %v542 = vsel %vm247, %v275, 0
    %v545 = vsel %vm247, %v276, 0
    %v548 = vsel %vm247, %v277, 0
    %v551 = vsel %vm247, %v278, 0
    %v554 = vsel %vm247, %v279, 0
    %v557 = vsel %vm247, %v280, 0
    %v560 = vsel %vm247, %v281, 0
    %v563 = vsel %vm247, %v282, 0
    %565 = vmatprep.subr.mxu0 0.0
    %566 = vmatpush1.msra.mxu0 0.0
    %567 = vmatprep.subr.mxu0 0.0
    %568 = vmatpush1.msra.mxu0 0.0
    %569 = vmatprep.subr.mxu0 0.0
    %570 = vmatpush1.msra.mxu0 0.0
    %571 = vmatprep.subr.mxu0 0.0
    %572 = vmatpush1.msra.mxu0 0.0
    %573 = vmatprep.subr.mxu0 0.0
    %574 = vmatpush1.msra.mxu0 0.0
    %575 = vmatprep.subr.mxu0 0.0
    %576 = vmatpush1.msra.mxu0 0.0
    %577 = vmatprep.subr.mxu0 0.0
    %578 = vmatpush1.msra.mxu0 0.0
    %579 = vmatprep.subr.mxu0 0.0
    %580 = vmatpush1.msra.mxu0 0.0
    %581 = vmatprep.subr.mxu0 0.0
    %582 = vmatpush1.msra.mxu0 0.0
    %583 = vmatprep.subr.mxu0 0.0
    %584 = vmatpush1.msra.mxu0 0.0
    %585 = vmatprep.subr.mxu0 0.0
    %586 = vmatpush1.msra.mxu0 0.0
    %587 = vmatprep.subr.mxu0 0.0
    %588 = vmatpush1.msra.mxu0 0.0
    %589 = vmatprep.subr.mxu0 0.0
    %590 = vmatpush1.msra.mxu0 %v286
    %591 = vmatprep.subr.mxu0 0.0
    %592 = vmatpush1.msra.mxu0 %v285
    %593 = vmatprep.subr.mxu0 0.0
    %594 = vmatpush1.msra.mxu0 %v284
    %595 = vmatprep.subr.mxu0 0.0
    %596 = vmatpush1.msra.mxu0 %v283
    %597 = vmatprep.subr.mxu0 0.0
    %598 = vmatpush2.msra.mxu0 0.0
    %599 = vmatprep.subr.mxu0 0.0
    %600 = vmatpush2.msra.mxu0 0.0
    %601 = vmatprep.subr.mxu0 0.0
    %602 = vmatpush2.msra.mxu0 0.0
    %603 = vmatprep.subr.mxu0 0.0
    %604 = vmatpush2.msra.mxu0 0.0
    %605 = vmatprep.subr.mxu0 0.0
    %606 = vmatpush2.msra.mxu0 0.0
    %607 = vmatprep.subr.mxu0 0.0
    %608 = vmatpush2.msra.mxu0 0.0
    %609 = vmatprep.subr.mxu0 0.0
    %610 = vmatpush2.msra.mxu0 0.0
    %611 = vmatprep.subr.mxu0 0.0
    %612 = vmatpush2.msra.mxu0 0.0
    %613 = vmatprep.subr.mxu0 0.0
    %614 = vmatpush2.msra.mxu0 0.0
    %615 = vmatprep.subr.mxu0 0.0
    %616 = vmatpush2.msra.mxu0 0.0
    %617 = vmatprep.subr.mxu0 0.0
    %618 = vmatpush2.msra.mxu0 0.0
    %619 = vmatprep.subr.mxu0 0.0
    %620 = vmatpush2.msra.mxu0 0.0
    %621 = vmatprep.subr.mxu0 0.0
    %622 = vmatpush2.msra.mxu0 0.0
    %623 = vmatprep.subr.mxu0 0.0
    %624 = vmatpush2.msra.mxu0 0.0
    %625 = vmatprep.subr.mxu0 0.0
    %626 = vmatpush2.msra.mxu0 0.0
    %627 = vmatprep.subr.mxu0 0.0
    %628 = vmatpush2.msra.mxu0 0.0
    %629 = vmatprep.mubr.f32.mxu0 0.0
    %630 = vmatmul.mubr.f32.gmra.mxu0 %v518
    %v631 = vpop.f32.mrf.mxu0
    %v632 = vadd.f32 %v439, %v631
    %v633 = vpop.f32.mrf.mxu0
    %634 = vmatprep.mubr.f32.mxu0 0.0
    %635 = vmatmul.mubr.f32.gmra.mxu0 %v521
    %v636 = vpop.f32.mrf.mxu0
    %v637 = vadd.f32 %v444, %v636
    %v638 = vpop.f32.mrf.mxu0
    %639 = vmatprep.mubr.f32.mxu0 0.0
    %640 = vmatmul.mubr.f32.gmra.mxu0 %v524
    %v641 = vpop.f32.mrf.mxu0
    %v642 = vadd.f32 %v449, %v641
    %v643 = vpop.f32.mrf.mxu0
    %644 = vmatprep.mubr.f32.mxu0 0.0
    %645 = vmatmul.mubr.f32.gmra.mxu0 %v527
    %v646 = vpop.f32.mrf.mxu0
    %v647 = vadd.f32 %v454, %v646
    %v648 = vpop.f32.mrf.mxu0
    %649 = vmatprep.mubr.f32.mxu0 0.0
    %650 = vmatmul.mubr.f32.gmra.mxu0 %v530
    %v651 = vpop.f32.mrf.mxu0
    %v652 = vadd.f32 %v459, %v651
    %v653 = vpop.f32.mrf.mxu0
    %654 = vmatprep.mubr.f32.mxu0 0.0
    %655 = vmatmul.mubr.f32.gmra.mxu0 %v533
    %v656 = vpop.f32.mrf.mxu0
    %v657 = vadd.f32 %v464, %v656
    %v658 = vpop.f32.mrf.mxu0
    %659 = vmatprep.mubr.f32.mxu0 0.0
    %660 = vmatmul.mubr.f32.gmra.mxu0 %v536
    %v661 = vpop.f32.mrf.mxu0
    %v662 = vadd.f32 %v469, %v661
    %v663 = vpop.f32.mrf.mxu0
    %664 = vmatprep.mubr.f32.mxu0 0.0
    %665 = vmatmul.mubr.f32.gmra.mxu0 %v539
    %v666 = vpop.f32.mrf.mxu0
    %v667 = vadd.f32 %v474, %v666
    %v668 = vpop.f32.mrf.mxu0
    %669 = vmatprep.mubr.f32.mxu0 0.0
    %670 = vmatmul.mubr.f32.gmra.mxu0 %v542
    %v671 = vpop.f32.mrf.mxu0
    %v672 = vadd.f32 %v479, %v671
    %v673 = vpop.f32.mrf.mxu0
    %674 = vmatprep.mubr.f32.mxu0 0.0
    %675 = vmatmul.mubr.f32.gmra.mxu0 %v545
    %v676 = vpop.f32.mrf.mxu0
    %v677 = vadd.f32 %v484, %v676
    %v678 = vpop.f32.mrf.mxu0
    %679 = vmatprep.mubr.f32.mxu0 0.0
    %680 = vmatmul.mubr.f32.gmra.mxu0 %v548
    %v681 = vpop.f32.mrf.mxu0
    %v682 = vadd.f32 %v489, %v681
    %v683 = vpop.f32.mrf.mxu0
    %684 = vmatprep.mubr.f32.mxu0 0.0
    %685 = vmatmul.mubr.f32.gmra.mxu0 %v551
    %v686 = vpop.f32.mrf.mxu0
    %v687 = vadd.f32 %v494, %v686
    %v688 = vpop.f32.mrf.mxu0
    %689 = vmatprep.mubr.f32.mxu0 0.0
    %690 = vmatmul.mubr.f32.gmra.mxu0 %v554
    %v691 = vpop.f32.mrf.mxu0
    %v692 = vadd.f32 %v499, %v691
    %v693 = vpop.f32.mrf.mxu0
    %694 = vmatprep.mubr.f32.mxu0 0.0
    %695 = vmatmul.mubr.f32.gmra.mxu0 %v557
    %v696 = vpop.f32.mrf.mxu0
    %v697 = vadd.f32 %v504, %v696
    %v698 = vpop.f32.mrf.mxu0
    %699 = vmatprep.mubr.f32.mxu0 0.0
    %700 = vmatmul.mubr.f32.gmra.mxu0 %v560
    %v701 = vpop.f32.mrf.mxu0
    %v702 = vadd.f32 %v509, %v701
    %v703 = vpop.f32.mrf.mxu0
    %704 = vmatprep.mubr.f32.mxu0 0.0
    %705 = vmatmul.mubr.f32.gmra.mxu0 %v563
    %v706 = vpop.f32.mrf.mxu0
    %v707 = vadd.f32 %v514, %v706
    %v708 = vpop.f32.mrf.mxu0
    %709 = vdwg.mxu0
    %v710 = vld [vmem:[%s4] sm:$0x1]
    %v711 = vlaneseq
    %v712 = vshrl.u32 %v711, 7
    %v713 = vsub.s32 0, %v712
    %v714 = vrot.slane %v710, %v713
    %v715 = vadd.f32 %v632, %v714
    %v716 = vadd.f32 %v637, %v714
    %v717 = vadd.f32 %v642, %v714
    %v718 = vadd.f32 %v647, %v714
    %v719 = vadd.f32 %v652, %v714
    %v720 = vadd.f32 %v657, %v714
    %v721 = vadd.f32 %v662, %v714
    %v722 = vadd.f32 %v667, %v714
    %v723 = vadd.f32 %v672, %v714
    %v724 = vadd.f32 %v677, %v714
    %v725 = vadd.f32 %v682, %v714
    %v726 = vadd.f32 %v687, %v714
    %v727 = vadd.f32 %v692, %v714
    %v728 = vadd.f32 %v697, %v714
    %v729 = vadd.f32 %v702, %v714
    %v730 = vadd.f32 %v707, %v714
    %v731 = vld [vmem:[%s4 + $0x1] sm:$0x1]
    %v732 = vld [vmem:[%s4 + $0x2] sm:$0x1]
    %v733 = vsel %vm247, %v715, 0.0
    %734 = vadd.xlane.f32.xlu0 %v733
    %v735 = vpop.xlane.xlu0 %734
    %v736 = vsel %vm247, %v716, 0.0
    %737 = vadd.xlane.f32.xlu0 %v736
    %v738 = vpop.xlane.xlu0 %737
    %v739 = vsel %vm247, %v717, 0.0
    %740 = vadd.xlane.f32.xlu0 %v739
    %v741 = vpop.xlane.xlu0 %740
    %v742 = vsel %vm247, %v718, 0.0
    %743 = vadd.xlane.f32.xlu0 %v742
    %v744 = vpop.xlane.xlu0 %743
    %v745 = vsel %vm247, %v719, 0.0
    %746 = vadd.xlane.f32.xlu0 %v745
    %v747 = vpop.xlane.xlu0 %746
    %v748 = vsel %vm247, %v720, 0.0
    %749 = vadd.xlane.f32.xlu0 %v748
    %v750 = vpop.xlane.xlu0 %749
    %v751 = vsel %vm247, %v721, 0.0
    %752 = vadd.xlane.f32.xlu0 %v751
    %v753 = vpop.xlane.xlu0 %752
    %v754 = vsel %vm247, %v722, 0.0
    %755 = vadd.xlane.f32.xlu0 %v754
    %v756 = vpop.xlane.xlu0 %755
    %v757 = vsel %vm247, %v723, 0.0
    %758 = vadd.xlane.f32.xlu0 %v757
    %v759 = vpop.xlane.xlu0 %758
    %v760 = vsel %vm247, %v724, 0.0
    %761 = vadd.xlane.f32.xlu0 %v760
    %v762 = vpop.xlane.xlu0 %761
    %v763 = vsel %vm247, %v725, 0.0
    %764 = vadd.xlane.f32.xlu0 %v763
    %v765 = vpop.xlane.xlu0 %764
    %v766 = vsel %vm247, %v726, 0.0
    %767 = vadd.xlane.f32.xlu0 %v766
    %v768 = vpop.xlane.xlu0 %767
    %v769 = vsel %vm247, %v727, 0.0
    %770 = vadd.xlane.f32.xlu0 %v769
    %v771 = vpop.xlane.xlu0 %770
    %v772 = vsel %vm247, %v728, 0.0
    %773 = vadd.xlane.f32.xlu0 %v772
    %v774 = vpop.xlane.xlu0 %773
    %v775 = vsel %vm247, %v729, 0.0
    %776 = vadd.xlane.f32.xlu0 %v775
    %v777 = vpop.xlane.xlu0 %776
    %v778 = vsel %vm247, %v730, 0.0
    %779 = vadd.xlane.f32.xlu0 %v778
    %v780 = vpop.xlane.xlu0 %779
    %v781 = vrcp.pop 32.0
    %v782 = vmul.f32 %v735, %v781
    %v783 = vmul.f32 %v738, %v781
    %v784 = vmul.f32 %v741, %v781
    %v785 = vmul.f32 %v744, %v781
    %v786 = vmul.f32 %v747, %v781
    %v787 = vmul.f32 %v750, %v781
    %v788 = vmul.f32 %v753, %v781
    %v789 = vmul.f32 %v756, %v781
    %v790 = vmul.f32 %v759, %v781
    %v791 = vmul.f32 %v762, %v781
    %v792 = vmul.f32 %v765, %v781
    %v793 = vmul.f32 %v768, %v781
    %v794 = vmul.f32 %v771, %v781
    %v795 = vmul.f32 %v774, %v781
    %v796 = vmul.f32 %v777, %v781
    %v797 = vmul.f32 %v780, %v781
    %v798 = vsub.f32 %v715, %v782
    %v799 = vsub.f32 %v716, %v783
    %v800 = vsub.f32 %v717, %v784
    %v801 = vsub.f32 %v718, %v785
    %v802 = vsub.f32 %v719, %v786
    %v803 = vsub.f32 %v720, %v787
    %v804 = vsub.f32 %v721, %v788
    %v805 = vsub.f32 %v722, %v789
    %v806 = vsub.f32 %v723, %v790
    %v807 = vsub.f32 %v724, %v791
    %v808 = vsub.f32 %v725, %v792
    %v809 = vsub.f32 %v726, %v793
    %v810 = vsub.f32 %v727, %v794
    %v811 = vsub.f32 %v728, %v795
    %v812 = vsub.f32 %v729, %v796
    %v813 = vsub.f32 %v730, %v797
    %v814 = vmul.f32 %v798, %v798
    %v815 = vmul.f32 %v799, %v799
    %v816 = vmul.f32 %v800, %v800
    %v817 = vmul.f32 %v801, %v801
    %v818 = vmul.f32 %v802, %v802
    %v819 = vmul.f32 %v803, %v803
    %v820 = vmul.f32 %v804, %v804
    %v821 = vmul.f32 %v805, %v805
    %v822 = vmul.f32 %v806, %v806
    %v823 = vmul.f32 %v807, %v807
    %v824 = vmul.f32 %v808, %v808
    %v825 = vmul.f32 %v809, %v809
    %v826 = vmul.f32 %v810, %v810
    %v827 = vmul.f32 %v811, %v811
    %v828 = vmul.f32 %v812, %v812
    %v829 = vmul.f32 %v813, %v813
    %v830 = vsel %vm247, %v814, 0.0
    %831 = vadd.xlane.f32.xlu0 %v830
    %v832 = vpop.xlane.xlu0 %831
    %v833 = vsel %vm247, %v815, 0.0
    %834 = vadd.xlane.f32.xlu0 %v833
    %v835 = vpop.xlane.xlu0 %834
    %v836 = vsel %vm247, %v816, 0.0
    %837 = vadd.xlane.f32.xlu0 %v836
    %v838 = vpop.xlane.xlu0 %837
    %v839 = vsel %vm247, %v817, 0.0
    %840 = vadd.xlane.f32.xlu0 %v839
    %v841 = vpop.xlane.xlu0 %840
    %v842 = vsel %vm247, %v818, 0.0
    %843 = vadd.xlane.f32.xlu0 %v842
    %v844 = vpop.xlane.xlu0 %843
    %v845 = vsel %vm247, %v819, 0.0
    %846 = vadd.xlane.f32.xlu0 %v845
    %v847 = vpop.xlane.xlu0 %846
    %v848 = vsel %vm247, %v820, 0.0
    %849 = vadd.xlane.f32.xlu0 %v848
    %v850 = vpop.xlane.xlu0 %849
    %v851 = vsel %vm247, %v821, 0.0
    %852 = vadd.xlane.f32.xlu0 %v851
    %v853 = vpop.xlane.xlu0 %852
    %v854 = vsel %vm247, %v822, 0.0
    %855 = vadd.xlane.f32.xlu0 %v854
    %v856 = vpop.xlane.xlu0 %855
    %v857 = vsel %vm247, %v823, 0.0
    %858 = vadd.xlane.f32.xlu0 %v857
    %v859 = vpop.xlane.xlu0 %858
    %v860 = vsel %vm247, %v824, 0.0
    %861 = vadd.xlane.f32.xlu0 %v860
    %v862 = vpop.xlane.xlu0 %861
    %v863 = vsel %vm247, %v825, 0.0
    %864 = vadd.xlane.f32.xlu0 %v863
    %v865 = vpop.xlane.xlu0 %864
    %v866 = vsel %vm247, %v826, 0.0
    %867 = vadd.xlane.f32.xlu0 %v866
    %v868 = vpop.xlane.xlu0 %867
    %v869 = vsel %vm247, %v827, 0.0
    %870 = vadd.xlane.f32.xlu0 %v869
    %v871 = vpop.xlane.xlu0 %870
    %v872 = vsel %vm247, %v828, 0.0
    %873 = vadd.xlane.f32.xlu0 %v872
    %v874 = vpop.xlane.xlu0 %873
    %v875 = vsel %vm247, %v829, 0.0
    %876 = vadd.xlane.f32.xlu0 %v875
    %v877 = vpop.xlane.xlu0 %876
    %v878 = vmul.f32 %v832, %v781
    %v879 = vmul.f32 %v835, %v781
    %v880 = vmul.f32 %v838, %v781
    %v881 = vmul.f32 %v841, %v781
    %v882 = vmul.f32 %v844, %v781
    %v883 = vmul.f32 %v847, %v781
    %v884 = vmul.f32 %v850, %v781
    %v885 = vmul.f32 %v853, %v781
    %v886 = vmul.f32 %v856, %v781
    %v887 = vmul.f32 %v859, %v781
    %v888 = vmul.f32 %v862, %v781
    %v889 = vmul.f32 %v865, %v781
    %v890 = vmul.f32 %v868, %v781
    %v891 = vmul.f32 %v871, %v781
    %v892 = vmul.f32 %v874, %v781
    %v893 = vmul.f32 %v877, %v781
    %v894 = vadd.f32 %v878, 1e-05
    %v895 = vadd.f32 %v879, 1e-05
    %v896 = vadd.f32 %v880, 1e-05
    %v897 = vadd.f32 %v881, 1e-05
    %v898 = vadd.f32 %v882, 1e-05
    %v899 = vadd.f32 %v883, 1e-05
    %v900 = vadd.f32 %v884, 1e-05
    %v901 = vadd.f32 %v885, 1e-05
    %v902 = vadd.f32 %v886, 1e-05
    %v903 = vadd.f32 %v887, 1e-05
    %v904 = vadd.f32 %v888, 1e-05
    %v905 = vadd.f32 %v889, 1e-05
    %v906 = vadd.f32 %v890, 1e-05
    %v907 = vadd.f32 %v891, 1e-05
    %v908 = vadd.f32 %v892, 1e-05
    %v909 = vadd.f32 %v893, 1e-05
    %v910 = vrsqrt.pop %v894
    %v911 = vrsqrt.pop %v895
    %v912 = vrsqrt.pop %v896
    %v913 = vrsqrt.pop %v897
    %v914 = vrsqrt.pop %v898
    %v915 = vrsqrt.pop %v899
    %v916 = vrsqrt.pop %v900
    %v917 = vrsqrt.pop %v901
    %v918 = vrsqrt.pop %v902
    %v919 = vrsqrt.pop %v903
    %v920 = vrsqrt.pop %v904
    %v921 = vrsqrt.pop %v905
    %v922 = vrsqrt.pop %v906
    %v923 = vrsqrt.pop %v907
    %v924 = vrsqrt.pop %v908
    %v925 = vrsqrt.pop %v909
    %v926 = vmul.f32 %v798, %v910
    %v927 = vmul.f32 %v799, %v911
    %v928 = vmul.f32 %v800, %v912
    %v929 = vmul.f32 %v801, %v913
    %v930 = vmul.f32 %v802, %v914
    %v931 = vmul.f32 %v803, %v915
    %v932 = vmul.f32 %v804, %v916
    %v933 = vmul.f32 %v805, %v917
    %v934 = vmul.f32 %v806, %v918
    %v935 = vmul.f32 %v807, %v919
    %v936 = vmul.f32 %v808, %v920
    %v937 = vmul.f32 %v809, %v921
    %v938 = vmul.f32 %v810, %v922
    %v939 = vmul.f32 %v811, %v923
    %v940 = vmul.f32 %v812, %v924
    %v941 = vmul.f32 %v813, %v925
    %v942 = vlaneseq
    %v943 = vshrl.u32 %v942, 7
    %v944 = vsub.s32 0, %v943
    %v945 = vrot.slane %v731, %v944
    %v946 = vmul.f32 %v926, %v945
    %v947 = vmul.f32 %v927, %v945
    %v948 = vmul.f32 %v928, %v945
    %v949 = vmul.f32 %v929, %v945
    %v950 = vmul.f32 %v930, %v945
    %v951 = vmul.f32 %v931, %v945
    %v952 = vmul.f32 %v932, %v945
    %v953 = vmul.f32 %v933, %v945
    %v954 = vmul.f32 %v934, %v945
    %v955 = vmul.f32 %v935, %v945
    %v956 = vmul.f32 %v936, %v945
    %v957 = vmul.f32 %v937, %v945
    %v958 = vmul.f32 %v938, %v945
    %v959 = vmul.f32 %v939, %v945
    %v960 = vmul.f32 %v940, %v945
    %v961 = vmul.f32 %v941, %v945
    %v962 = vlaneseq
    %v963 = vshrl.u32 %v962, 7
    %v964 = vsub.s32 0, %v963
    %v965 = vrot.slane %v732, %v964
    %v966 = vadd.f32 %v946, %v965
    %v967 = vadd.f32 %v947, %v965
    %v968 = vadd.f32 %v948, %v965
    %v969 = vadd.f32 %v949, %v965
    %v970 = vadd.f32 %v950, %v965
    %v971 = vadd.f32 %v951, %v965
    %v972 = vadd.f32 %v952, %v965
    %v973 = vadd.f32 %v953, %v965
    %v974 = vadd.f32 %v954, %v965
    %v975 = vadd.f32 %v955, %v965
    %v976 = vadd.f32 %v956, %v965
    %v977 = vadd.f32 %v957, %v965
    %v978 = vadd.f32 %v958, %v965
    %v979 = vadd.f32 %v959, %v965
    %v980 = vadd.f32 %v960, %v965
    %v981 = vadd.f32 %v961, %v965
    %v982 = vmax.f32 %v966, 0.0
    %v983 = vmax.f32 %v967, 0.0
    %v984 = vmax.f32 %v968, 0.0
    %v985 = vmax.f32 %v969, 0.0
    %v986 = vmax.f32 %v970, 0.0
    %v987 = vmax.f32 %v971, 0.0
    %v988 = vmax.f32 %v972, 0.0
    %v989 = vmax.f32 %v973, 0.0
    %v990 = vmax.f32 %v974, 0.0
    %v991 = vmax.f32 %v975, 0.0
    %v992 = vmax.f32 %v976, 0.0
    %v993 = vmax.f32 %v977, 0.0
    %v994 = vmax.f32 %v978, 0.0
    %v995 = vmax.f32 %v979, 0.0
    %v996 = vmax.f32 %v980, 0.0
    %v997 = vmax.f32 %v981, 0.0
    %v998 = vpack.c.bf16 %v983, %v982
    %v999 = vpack.c.bf16 %v985, %v984
    %v1000 = vpack.c.bf16 %v987, %v986
    %v1001 = vpack.c.bf16 %v989, %v988
    %v1002 = vpack.c.bf16 %v991, %v990
    %v1003 = vpack.c.bf16 %v993, %v992
    %v1004 = vpack.c.bf16 %v995, %v994
    %v1005 = vpack.c.bf16 %v997, %v996
    %v1014 = vunpack.c.l.b16 %v998
    %v1015 = vunpack.c.h.b16 %v998
    %v1016 = vunpack.c.l.b16 %v999
    %v1017 = vunpack.c.h.b16 %v999
    %v1018 = vunpack.c.l.b16 %v1000
    %v1019 = vunpack.c.h.b16 %v1000
    %v1020 = vunpack.c.l.b16 %v1001
    %v1021 = vunpack.c.h.b16 %v1001
    %v1022 = vunpack.c.l.b16 %v1002
    %v1023 = vunpack.c.h.b16 %v1002
    %v1024 = vunpack.c.l.b16 %v1003
    %v1025 = vunpack.c.h.b16 %v1003
    %v1026 = vunpack.c.l.b16 %v1004
    %v1027 = vunpack.c.h.b16 %v1004
    %v1028 = vunpack.c.l.b16 %v1005
    %v1029 = vunpack.c.h.b16 %v1005
    %v1030 = vpack.c.b16 %v1014, %v1014
    %v1031 = vpack.c.b16 %v1015, %v1015
    %v1032 = vpack.c.b16 %v1016, %v1016
    %v1033 = vpack.c.b16 %v1017, %v1017
    %v1034 = vpack.c.b16 %v1018, %v1018
    %v1035 = vpack.c.b16 %v1019, %v1019
    %v1036 = vpack.c.b16 %v1020, %v1020
    %v1037 = vpack.c.b16 %v1021, %v1021
    %v1038 = vpack.c.b16 %v1022, %v1022
    %v1039 = vpack.c.b16 %v1023, %v1023
    %v1040 = vpack.c.b16 %v1024, %v1024
    %v1041 = vpack.c.b16 %v1025, %v1025
    %v1042 = vpack.c.b16 %v1026, %v1026
    %v1043 = vpack.c.b16 %v1027, %v1027
    %v1044 = vpack.c.b16 %v1028, %v1028
    %v1045 = vpack.c.b16 %v1029, %v1029
    %vm1062 = vcmask 257024
    %1063 = vst.msk [vmem:[%s5] sm:$0xf] %vm1062, %v1030
    %1064 = vst.msk [vmem:[%s5 + $0x4] sm:$0xf] %vm1062, %v1031
    %1065 = vst.msk [vmem:[%s5 + $0x8] sm:$0xf] %vm1062, %v1032
    %1066 = vst.msk [vmem:[%s5 + $0xc] sm:$0xf] %vm1062, %v1033
    %1067 = vst.msk [vmem:[%s5 + $0x10] sm:$0xf] %vm1062, %v1034
    %1068 = vst.msk [vmem:[%s5 + $0x14] sm:$0xf] %vm1062, %v1035
    %1069 = vst.msk [vmem:[%s5 + $0x18] sm:$0xf] %vm1062, %v1036
    %1070 = vst.msk [vmem:[%s5 + $0x1c] sm:$0xf] %vm1062, %v1037
    %1071 = vst.msk [vmem:[%s5 + $0x20] sm:$0xf] %vm1062, %v1038
    %1072 = vst.msk [vmem:[%s5 + $0x24] sm:$0xf] %vm1062, %v1039
    %1073 = vst.msk [vmem:[%s5 + $0x28] sm:$0xf] %vm1062, %v1040
    %1074 = vst.msk [vmem:[%s5 + $0x2c] sm:$0xf] %vm1062, %v1041
    %1075 = vst.msk [vmem:[%s5 + $0x30] sm:$0xf] %vm1062, %v1042
    %1076 = vst.msk [vmem:[%s5 + $0x34] sm:$0xf] %vm1062, %v1043
    %1077 = vst.msk [vmem:[%s5 + $0x38] sm:$0xf] %vm1062, %v1044
    %1078 = vst.msk [vmem:[%s5 + $0x3c] sm:$0xf] %vm1062, %v1045
  $region29: #{tpu_custom_call.1} parent=0 // pred_fallthru
    _
  // Predicated region
  $region30: #{tpu_custom_call.1} parent=0 // pred_check
    _
  $region31: #{tpu_custom_call.1} parent=0 // pred_check_branch
    %1080 = sbr.rel (0) target = $region33
  $region32: #{tpu_custom_call.1} parent=0 // pred_region
    _
  $region33: #{tpu_custom_call.1} parent=0 // pred_fallthru
    _
  // Predicated region
  $region34: #{tpu_custom_call.1} parent=0 // pred_check
    _
  $region35: #{tpu_custom_call.1} parent=0 // pred_check_branch
    %1082 = sbr.rel (0) target = $region37
  $region36: #{tpu_custom_call.1} parent=0 // pred_region
    _
  $region37: #{tpu_custom_call.1} parent=0 // pred_fallthru
    _

</llo_original>
